<compile_context>
chip_gen: v7x
topology: tpu7x:2x2x1
jax: 0.10.0
libtpu: 0.0.40
codegen_flags: <defaults>
</compile_context>

<pallas_src>
import functools

import jax
import jax.numpy as jnp
from jax.experimental import pallas as pl
from jax.experimental.pallas import tpu as pltpu

_LANE = 128
_SUBLANE = 16  # satisfies both f32 (8) and bf16 (16) sublane tiling for batch tiles


def _round_up(x, m):
    return ((x + m - 1) // m) * m


def _mlp_kernel(n_linear, *refs):
    """Fused MLP: x @ W0 + b0 -> ReLU -> ... -> x @ W_last + b_last.

    refs = (x_ref, W0, b0, W1, b1, ..., W_last, b_last, out_ref).
    Matmuls run in the weights' dtype (bf16 on the fast path) on the MXU with
    f32 accumulation; bias add and ReLU stay on the f32 accumulator.
    """
    x_ref = refs[0]
    out_ref = refs[-1]
    wb = refs[1:-1]

    h = x_ref[...]                                    # (TB, in_pad) compute dtype
    for i in range(n_linear):
        w = wb[2 * i][...]                            # (in_pad, out_pad) compute dtype
        b = wb[2 * i + 1][...]                        # (1, out_pad) f32
        acc = jnp.dot(h, w, preferred_element_type=jnp.float32) + b
        if i < n_linear - 1:                          # hidden layers only
            acc = jnp.maximum(acc, 0.0)
            h = acc.astype(w.dtype)                   # back to MXU dtype for next layer
        else:
            h = acc
    out_ref[...] = h.astype(out_ref.dtype)


def unmasking_contrastive_forward(x, weights, biases, *, block_b=512,
                                  compute_dtype=jnp.bfloat16):
    """x: (B, S, F).  weights[i]: (in_i, out_i), biases[i]: (out_i,)."""
    B = x.shape[0]
    out_dtype = x.dtype
    x2d = x.reshape(B, -1)                            # flatten(start_dim=1)
    D = x2d.shape[1]
    n_linear = len(weights)
    out_dim = weights[-1].shape[1]

    # ---- pad so every matmul operand / store is lane- and sublane-aligned ----
    D_pad = _round_up(D, _LANE)
    TB = _round_up(min(block_b, _round_up(B, _SUBLANE)), _SUBLANE)
    B_pad = _round_up(B, TB)

    x_p = jnp.zeros((B_pad, D_pad), compute_dtype)
    x_p = x_p.at[:B, :D].set(x2d.astype(compute_dtype))

    w_p, b_p = [], []
    in_pad = D_pad
    for w, b in zip(weights, biases):
        w_in, w_out = w.shape
        o_pad = _round_up(w_out, _LANE)
        wp = jnp.zeros((in_pad, o_pad), compute_dtype)
        wp = wp.at[:w_in, :w_out].set(w.astype(compute_dtype))
        bp = jnp.zeros((1, o_pad), jnp.float32)
        bp = bp.at[0, :w_out].set(b.astype(jnp.float32))
        w_p.append(wp)
        b_p.append(bp)
        in_pad = o_pad
    out_pad = w_p[-1].shape[1]

    operands = [x_p]
    for wp, bp in zip(w_p, b_p):
        operands.append(wp)
        operands.append(bp)

    # ---- specs: batch-tiled x / out; VMEM-resident weights & biases ----
    grid = (B_pad // TB,)
    in_specs = [pl.BlockSpec((TB, D_pad), lambda i: (i, 0))]
    for wp, bp in zip(w_p, b_p):
        in_specs.append(pl.BlockSpec(wp.shape, lambda i: (0, 0)))
        in_specs.append(pl.BlockSpec(bp.shape, lambda i: (0, 0)))
    out_specs = pl.BlockSpec((TB, out_pad), lambda i: (i, 0))

    flops = sum(2 * B_pad * wp.shape[0] * wp.shape[1] for wp in w_p)
    bytes_accessed = (x_p.size * x_p.dtype.itemsize
                      + B_pad * out_pad * jnp.dtype(out_dtype).itemsize
                      + sum(wp.size * wp.dtype.itemsize for wp in w_p)
                      + sum(bp.size * bp.dtype.itemsize for bp in b_p))

    out = pl.pallas_call(
        functools.partial(_mlp_kernel, n_linear),
        out_shape=jax.ShapeDtypeStruct((B_pad, out_pad), out_dtype),
        grid=grid,
        in_specs=in_specs,
        out_specs=out_specs,
        compiler_params=pltpu.CompilerParams(
            dimension_semantics=("parallel",)),
        cost_estimate=pl.CostEstimate(
            flops=int(flops), transcendentals=0,
            bytes_accessed=int(bytes_accessed)),
    )(*operands)

    # slice off batch / lane padding
    return out[:B, :out_dim]


def init_params(key, dim_sequence, dim_features, dim_layers, dim_embedding):
    """Deterministic init mirroring torch.nn.Linear shapes (stored transposed)."""
    in_dim = dim_sequence * dim_features
    dims = list(dim_layers) + [dim_embedding]
    weights, biases = [], []
    for out_dim in dims:
        key, kw, kb = jax.random.split(key, 3)
        bound = 1.0 / jnp.sqrt(in_dim)
        w = jax.random.uniform(kw, (in_dim, out_dim), jnp.float32, -bound, bound)
        b = jax.random.uniform(kb, (out_dim,), jnp.float32, -bound, bound)
        weights.append(w)
        biases.append(b)
        in_dim = out_dim
    return weights, biases


if __name__ == "__main__":
    # Small shapes consistent with the module.
    param = {
        "dim_sequence": 8,
        "dim_features": 32,
        "unmasking_contrastive_dim_layers": [128, 128],
        "unmasking_contrastive_dim_embedding_space": 32,
    }
    B = 2

    key = jax.random.PRNGKey(0)
    key, kx = jax.random.split(key)
    x = jax.random.normal(
        kx, (B, param["dim_sequence"], param["dim_features"]), jnp.float32
    )

    weights, biases = init_params(
        key,
        param["dim_sequence"],
        param["dim_features"],
        param["unmasking_contrastive_dim_layers"],
        param["unmasking_contrastive_dim_embedding_space"],
    )

    # Pure-JAX f32 reference (highest precision so the comparison is meaningful).
    h = x.reshape(B, -1)
    for i, (w, b) in enumerate(zip(weights, biases)):
        h = jax.lax.dot(h, w, precision=jax.lax.Precision.HIGHEST) + b
        if i < len(weights) - 1:
            h = jnp.maximum(h, 0.0)
    ref = h

    out_dim = param["unmasking_contrastive_dim_embedding_space"]

    # f32 compute path: semantics check with tight tolerance.
    out_f32 = unmasking_contrastive_forward(
        x, weights, biases, compute_dtype=jnp.float32)
    out_f32 = jax.block_until_ready(out_f32)
    assert out_f32.shape == (B, out_dim)
    assert jnp.allclose(out_f32, ref, atol=1e-3, rtol=1e-3)

    # bf16 fast path (native MXU dtype, f32 accumulation): loosened tolerance.
    out_bf16 = unmasking_contrastive_forward(
        x, weights, biases, compute_dtype=jnp.bfloat16)
    out_bf16 = jax.block_until_ready(out_bf16)
    assert out_bf16.shape == (B, out_dim)
    assert jnp.allclose(out_bf16, ref, atol=3e-2, rtol=3e-2)

    print("KERNEL_OK")
</pallas_src>

<mosaic_0001>
module attributes {stable_mosaic.version = 11 : i64} {
  func.func @_mlp_kernel(%arg0: i32, %arg1: memref<16x256xf32, #tpu.memory_space<vmem>>, %arg2: memref<256x128xf32, #tpu.memory_space<vmem>>, %arg3: memref<1x128xf32, #tpu.memory_space<vmem>>, %arg4: memref<128x128xf32, #tpu.memory_space<vmem>>, %arg5: memref<1x128xf32, #tpu.memory_space<vmem>>, %arg6: memref<128x128xf32, #tpu.memory_space<vmem>>, %arg7: memref<1x128xf32, #tpu.memory_space<vmem>>, %arg8: memref<16x128xf32, #tpu.memory_space<vmem>>) attributes {dimension_semantics = [#tpu.dimension_semantics<parallel>], iteration_bounds = array<i64: 1>, scalar_prefetch = 0 : i64, scratch_operands = 0 : i64, tpu.core_type = #tpu.core_type<tc>, window_params = [{transform_indices = @transform_0, window_bounds = array<i64: 16, 256>}, {pipeline_mode = #tpu.pipeline_mode<synchronous>, transform_indices = @transform_1, window_bounds = array<i64: 256, 128>}, {pipeline_mode = #tpu.pipeline_mode<synchronous>, transform_indices = @transform_2, window_bounds = array<i64: 1, 128>}, {pipeline_mode = #tpu.pipeline_mode<synchronous>, transform_indices = @transform_3, window_bounds = array<i64: 128, 128>}, {pipeline_mode = #tpu.pipeline_mode<synchronous>, transform_indices = @transform_4, window_bounds = array<i64: 1, 128>}, {pipeline_mode = #tpu.pipeline_mode<synchronous>, transform_indices = @transform_5, window_bounds = array<i64: 128, 128>}, {pipeline_mode = #tpu.pipeline_mode<synchronous>, transform_indices = @transform_6, window_bounds = array<i64: 1, 128>}, {transform_indices = @transform_7, window_bounds = array<i64: 16, 128>}]} {
    %c0 = arith.constant 0 : index
    %c0_0 = arith.constant 0 : index
    %0 = vector.load %arg1[%c0, %c0_0] : memref<16x256xf32, #tpu.memory_space<vmem>>, vector<16x256xf32>
    %c0_1 = arith.constant 0 : index
    %c0_2 = arith.constant 0 : index
    %1 = vector.load %arg2[%c0_1, %c0_2] : memref<256x128xf32, #tpu.memory_space<vmem>>, vector<256x128xf32>
    %c0_3 = arith.constant 0 : index
    %c0_4 = arith.constant 0 : index
    %2 = vector.load %arg3[%c0_3, %c0_4] : memref<1x128xf32, #tpu.memory_space<vmem>>, vector<1x128xf32>
    %cst = arith.constant dense<0.000000e+00> : vector<16x128xf32>
    %3 = tpu.matmul %0, %1, %cst {dimension_numbers = #tpu.dot_dimension_numbers<[1], [0], [0], [1], [0, 0, 1, 1], [], []>} : vector<16x256xf32>, vector<256x128xf32>, vector<16x128xf32> -> vector<16x128xf32>
    %4 = vector.broadcast %2 : vector<1x128xf32> to vector<16x128xf32>
    %5 = arith.addf %3, %4 : vector<16x128xf32>
    %cst_5 = arith.constant 0.000000e+00 : f32
    %6 = vector.broadcast %cst_5 : f32 to vector<16x128xf32>
    %7 = arith.maximumf %5, %6 : vector<16x128xf32>
    %c0_6 = arith.constant 0 : index
    %c0_7 = arith.constant 0 : index
    %8 = vector.load %arg4[%c0_6, %c0_7] : memref<128x128xf32, #tpu.memory_space<vmem>>, vector<128x128xf32>
    %c0_8 = arith.constant 0 : index
    %c0_9 = arith.constant 0 : index
    %9 = vector.load %arg5[%c0_8, %c0_9] : memref<1x128xf32, #tpu.memory_space<vmem>>, vector<1x128xf32>
    %cst_10 = arith.constant dense<0.000000e+00> : vector<16x128xf32>
    %10 = tpu.matmul %7, %8, %cst_10 {dimension_numbers = #tpu.dot_dimension_numbers<[1], [0], [0], [1], [0, 0, 1, 1], [], []>} : vector<16x128xf32>, vector<128x128xf32>, vector<16x128xf32> -> vector<16x128xf32>
    %11 = vector.broadcast %9 : vector<1x128xf32> to vector<16x128xf32>
    %12 = arith.addf %10, %11 : vector<16x128xf32>
    %cst_11 = arith.constant 0.000000e+00 : f32
    %13 = vector.broadcast %cst_11 : f32 to vector<16x128xf32>
    %14 = arith.maximumf %12, %13 : vector<16x128xf32>
    %c0_12 = arith.constant 0 : index
    %c0_13 = arith.constant 0 : index
    %15 = vector.load %arg6[%c0_12, %c0_13] : memref<128x128xf32, #tpu.memory_space<vmem>>, vector<128x128xf32>
    %c0_14 = arith.constant 0 : index
    %c0_15 = arith.constant 0 : index
    %16 = vector.load %arg7[%c0_14, %c0_15] : memref<1x128xf32, #tpu.memory_space<vmem>>, vector<1x128xf32>
    %cst_16 = arith.constant dense<0.000000e+00> : vector<16x128xf32>
    %17 = tpu.matmul %14, %15, %cst_16 {dimension_numbers = #tpu.dot_dimension_numbers<[1], [0], [0], [1], [0, 0, 1, 1], [], []>} : vector<16x128xf32>, vector<128x128xf32>, vector<16x128xf32> -> vector<16x128xf32>
    %18 = vector.broadcast %16 : vector<1x128xf32> to vector<16x128xf32>
    %19 = arith.addf %17, %18 : vector<16x128xf32>
    %c0_17 = arith.constant 0 : index
    %c0_18 = arith.constant 0 : index
    %20 = vector.load %arg8[%c0_17, %c0_18] : memref<16x128xf32, #tpu.memory_space<vmem>>, vector<16x128xf32>
    tpu.vector_store %arg8[%c0_17, %c0_18], %19 {strides = array<i32>} : memref<16x128xf32, #tpu.memory_space<vmem>>, vector<16x128xf32>,
    return
  }
  func.func @transform_0(%arg0: i32) -> (i32, i32) {
    %c0_i32 = arith.constant 0 : i32
    %c0_i32_0 = arith.constant 0 : i32
    return %arg0, %c0_i32 : i32, i32
  }
  func.func @transform_1(%arg0: i32) -> (i32, i32) {
    %c0_i32 = arith.constant 0 : i32
    %c0_i32_0 = arith.constant 0 : i32
    %c0_i32_1 = arith.constant 0 : i32
    return %c0_i32, %c0_i32_0 : i32, i32
  }
  func.func @transform_2(%arg0: i32) -> (i32, i32) {
    %c0_i32 = arith.constant 0 : i32
    %c0_i32_0 = arith.constant 0 : i32
    %c0_i32_1 = arith.constant 0 : i32
    return %c0_i32, %c0_i32_0 : i32, i32
  }
  func.func @transform_3(%arg0: i32) -> (i32, i32) {
    %c0_i32 = arith.constant 0 : i32
    %c0_i32_0 = arith.constant 0 : i32
    %c0_i32_1 = arith.constant 0 : i32
    return %c0_i32, %c0_i32_0 : i32, i32
  }
  func.func @transform_4(%arg0: i32) -> (i32, i32) {
    %c0_i32 = arith.constant 0 : i32
    %c0_i32_0 = arith.constant 0 : i32
    %c0_i32_1 = arith.constant 0 : i32
    return %c0_i32, %c0_i32_0 : i32, i32
  }
  func.func @transform_5(%arg0: i32) -> (i32, i32) {
    %c0_i32 = arith.constant 0 : i32
    %c0_i32_0 = arith.constant 0 : i32
    %c0_i32_1 = arith.constant 0 : i32
    return %c0_i32, %c0_i32_0 : i32, i32
  }
  func.func @transform_6(%arg0: i32) -> (i32, i32) {
    %c0_i32 = arith.constant 0 : i32
    %c0_i32_0 = arith.constant 0 : i32
    %c0_i32_1 = arith.constant 0 : i32
    return %c0_i32, %c0_i32_0 : i32, i32
  }
  func.func @transform_7(%arg0: i32) -> (i32, i32) {
    %c0_i32 = arith.constant 0 : i32
    %c0_i32_0 = arith.constant 0 : i32
    return %arg0, %c0_i32 : i32, i32
  }
}

</mosaic_0001>

<llo_original>
// kernel: tpu_custom_call.1
$region0: #{tpu_custom_call.1}
  #allocation0 [shape = 'u32[]', space=smem, size = 0x4, offset = 0x4, fixed_abs, tag = 'smem constant byte address 0x4 - core index']
  #allocation1 [shape = 'u32[144,128]{1,0:T(1,128)}', space=vmem, size = 0x12000, scoped, tag = 'internal scratch']
  %s0 = inlined_call_operand.hbm [shape: f32[16,256], index: 0, kind: input, shape index: {}]
  %s1 = inlined_call_operand.hbm [shape: f32[256,128], index: 1, kind: input, shape index: {}]
  %s2 = inlined_call_operand.vmem [shape: f32[1,128], index: 2, kind: input, shape index: {}]
  %s3 = inlined_call_operand.hbm [shape: f32[128,128], index: 3, kind: input, shape index: {}]
  %s4 = inlined_call_operand.vmem [shape: f32[1,128], index: 4, kind: input, shape index: {}]
  %s5 = inlined_call_operand.hbm [shape: f32[128,128], index: 5, kind: input, shape index: {}]
  %s6 = inlined_call_operand.vmem [shape: f32[1,128], index: 6, kind: input, shape index: {}]
  %s7 = inlined_call_operand.hbm [shape: f32[16,128], index: 7, kind: output, shape index: {}]
  %s8 = sld [smem:[#allocation0]]
  $region54: #{tpu_custom_call.1} parent=0
    _
  %s10 = ssub.s32 1, %s8
  %s11 = scalar_select 0, %s10, %s8
  $region1: #{tpu_custom_call.1} parent=0
    #allocation2 [shape = 'u8[16384]{0}', space=vmem, size = 0x4000, scoped, tag = 'input window, operand 0, single buffered']
    #allocation3 [shape = 's32[1]{0}', space=sflag, size = 0x4, scoped, tag = 'scoped memory for tpu_custom_call.1']
    #allocation4 [shape = 's32[1]{0}', space=sflag, size = 0x4, scoped, tag = 'scoped memory for tpu_custom_call.1']
    #allocation5 [shape = 'u8[131072]{0}', space=vmem, size = 0x20000, scoped, tag = 'input window, operand 1, single buffered']
    #allocation6 [shape = 's32[1]{0}', space=sflag, size = 0x4, scoped, tag = 'scoped memory for tpu_custom_call.1']
    #allocation7 [shape = 'u8[65536]{0}', space=vmem, size = 0x10000, scoped, tag = 'input window, operand 3, single buffered']
    #allocation8 [shape = 'u8[65536]{0}', space=vmem, size = 0x10000, scoped, tag = 'input window, operand 5, single buffered']
    #allocation9 [shape = 's32[1]{0}', space=sflag, size = 0x4, scoped, tag = 'scoped memory for tpu_custom_call.1']
    #allocation10 [shape = 'u8[8192]{0}', space=vmem, size = 0x2000, scoped, tag = 'output window, operand 0, single buffered']
    %12 = vsyncpa [#allocation3], 0
    %13 = vsyncpa [#allocation6], 0
    %14 = vsyncpa [#allocation9], 0
    %15 = vsyncpa [#allocation4], 0
    // Predicated region
    $region2: #{tpu_custom_call.1} parent=1 // pred_check
      _
    $region3: #{tpu_custom_call.1} parent=1 // pred_check_branch
      %17 = sbr.rel (0) target = $region5
    $region4: #{tpu_custom_call.1} parent=1 // pred_region
      %s19 = ssub.s32 512, 512
      %20 = vsyncadd [#allocation3], %s19
      %s21 = sshll.u32 [#allocation2], 4
      %s22 = int_to_ptr.vmem [resolvable:$true] %s21
      %27 = dma.hbm_to_vmem [thread:$0]  %s0, 512, %s22, [#allocation3], 256, 256, 16
    $region5: #{tpu_custom_call.1} parent=1 // pred_fallthru
      _
    // Predicated region
    $region6: #{tpu_custom_call.1} parent=1 // pred_check
      _
    $region7: #{tpu_custom_call.1} parent=1 // pred_check_branch
      %29 = sbr.rel (0) target = $region9
    $region8: #{tpu_custom_call.1} parent=1 // pred_region
      %s31 = ssub.s32 4096, 4096
      %32 = vsyncadd [#allocation6], %s31
      %s33 = sshll.u32 [#allocation5], 4
      %s34 = int_to_ptr.vmem [resolvable:$true] %s33
      %39 = dma.hbm_to_vmem [thread:$0]  %s1, 4096, %s34, [#allocation6], 128, 128, 8
    $region9: #{tpu_custom_call.1} parent=1 // pred_fallthru
      _
    // Predicated region
    $region10: #{tpu_custom_call.1} parent=1 // pred_check
      _
    $region11: #{tpu_custom_call.1} parent=1 // pred_check_branch
      %41 = sbr.rel (0) target = $region13
    $region12: #{tpu_custom_call.1} parent=1 // pred_region
      _
    $region13: #{tpu_custom_call.1} parent=1 // pred_fallthru
      _
    // Predicated region
    $region14: #{tpu_custom_call.1} parent=1 // pred_check
      _
    $region15: #{tpu_custom_call.1} parent=1 // pred_check_branch
      %43 = sbr.rel (0) target = $region17
    $region16: #{tpu_custom_call.1} parent=1 // pred_region
      %s45 = ssub.s32 2048, 2048
      %46 = vsyncadd [#allocation6], %s45
      %s47 = sshll.u32 [#allocation7], 4
      %s48 = int_to_ptr.vmem [resolvable:$true] %s47
      %53 = dma.hbm_to_vmem [thread:$0]  %s3, 2048, %s48, [#allocation6], 128, 128, 8
    $region17: #{tpu_custom_call.1} parent=1 // pred_fallthru
      _
    // Predicated region
    $region18: #{tpu_custom_call.1} parent=1 // pred_check
      _
    $region19: #{tpu_custom_call.1} parent=1 // pred_check_branch
      %55 = sbr.rel (0) target = $region21
    $region20: #{tpu_custom_call.1} parent=1 // pred_region
      _
    $region21: #{tpu_custom_call.1} parent=1 // pred_fallthru
      _
    // Predicated region
    $region22: #{tpu_custom_call.1} parent=1 // pred_check
      _
    $region23: #{tpu_custom_call.1} parent=1 // pred_check_branch
      %57 = sbr.rel (0) target = $region25
    $region24: #{tpu_custom_call.1} parent=1 // pred_region
      %s59 = ssub.s32 2048, 2048
      %60 = vsyncadd [#allocation9], %s59
      %s61 = sshll.u32 [#allocation8], 4
      %s62 = int_to_ptr.vmem [resolvable:$true] %s61
      %67 = dma.hbm_to_vmem [thread:$0]  %s5, 2048, %s62, [#allocation9], 128, 128, 8
    $region25: #{tpu_custom_call.1} parent=1 // pred_fallthru
      _
    // Predicated region
    $region26: #{tpu_custom_call.1} parent=1 // pred_check
      _
    $region27: #{tpu_custom_call.1} parent=1 // pred_check_branch
      %69 = sbr.rel (0) target = $region29
    $region28: #{tpu_custom_call.1} parent=1 // pred_region
      _
    $region29: #{tpu_custom_call.1} parent=1 // pred_fallthru
      _
    // Predicated region
    $region30: #{tpu_custom_call.1} parent=1 // pred_check
      _
    $region31: #{tpu_custom_call.1} parent=1 // pred_check_branch
      %71 = sbr.rel (0) target = $region33
    $region32: #{tpu_custom_call.1} parent=1 // pred_region
      %72 = dma.done [#allocation3], 512
    $region33: #{tpu_custom_call.1} parent=1 // pred_fallthru
      _
    // Predicated region
    $region34: #{tpu_custom_call.1} parent=1 // pred_check
      _
    $region35: #{tpu_custom_call.1} parent=1 // pred_check_branch
      %74 = sbr.rel (0) target = $region37
    $region36: #{tpu_custom_call.1} parent=1 // pred_region
      %75 = dma.done [#allocation6], 4096
    $region37: #{tpu_custom_call.1} parent=1 // pred_fallthru
      _
    // Predicated region
    $region38: #{tpu_custom_call.1} parent=1 // pred_check
      _
    $region39: #{tpu_custom_call.1} parent=1 // pred_check_branch
      %77 = sbr.rel (0) target = $region41
    $region40: #{tpu_custom_call.1} parent=1 // pred_region
      %78 = dma.done [#allocation6], 2048
    $region41: #{tpu_custom_call.1} parent=1 // pred_fallthru
      _
    // Predicated region
    $region42: #{tpu_custom_call.1} parent=1 // pred_check
      _
    $region43: #{tpu_custom_call.1} parent=1 // pred_check_branch
      %80 = sbr.rel (0) target = $region45
    $region44: #{tpu_custom_call.1} parent=1 // pred_region
      %81 = dma.done [#allocation9], 2048
    $region45: #{tpu_custom_call.1} parent=1 // pred_fallthru
      _
    %v82 = vld [vmem:[#allocation2] sm:$0xff]
    %v83 = vld [vmem:[#allocation2 + $0x8] sm:$0xff]
    %v84 = vld [vmem:[#allocation2 + $0x10] sm:$0xff]
    %v85 = vld [vmem:[#allocation2 + $0x18] sm:$0xff]
    %v86 = vld [vmem:[#allocation5] sm:$0xff]
    %v87 = vld [vmem:[#allocation5 + $0x8] sm:$0xff]
    %v88 = vld [vmem:[#allocation5 + $0x10] sm:$0xff]
    %v89 = vld [vmem:[#allocation5 + $0x18] sm:$0xff]
    %v90 = vld [vmem:[#allocation5 + $0x20] sm:$0xff]
    %v91 = vld [vmem:[#allocation5 + $0x28] sm:$0xff]
    %v92 = vld [vmem:[#allocation5 + $0x30] sm:$0xff]
    %v93 = vld [vmem:[#allocation5 + $0x38] sm:$0xff]
    %v94 = vld [vmem:[#allocation5 + $0x40] sm:$0xff]
    %v95 = vld [vmem:[#allocation5 + $0x48] sm:$0xff]
    %v96 = vld [vmem:[#allocation5 + $0x50] sm:$0xff]
    %v97 = vld [vmem:[#allocation5 + $0x58] sm:$0xff]
    %v98 = vld [vmem:[#allocation5 + $0x60] sm:$0xff]
    %v99 = vld [vmem:[#allocation5 + $0x68] sm:$0xff]
    %v100 = vld [vmem:[#allocation5 + $0x70] sm:$0xff]
    %v101 = vld [vmem:[#allocation5 + $0x78] sm:$0xff]
    %v102 = vld [vmem:[#allocation5 + $0x80] sm:$0xff]
    %v103 = vld [vmem:[#allocation5 + $0x88] sm:$0xff]
    %v104 = vld [vmem:[#allocation5 + $0x90] sm:$0xff]
    %v105 = vld [vmem:[#allocation5 + $0x98] sm:$0xff]
    %v106 = vld [vmem:[#allocation5 + $0xa0] sm:$0xff]
    %v107 = vld [vmem:[#allocation5 + $0xa8] sm:$0xff]
    %v108 = vld [vmem:[#allocation5 + $0xb0] sm:$0xff]
    %v109 = vld [vmem:[#allocation5 + $0xb8] sm:$0xff]
    %v110 = vld [vmem:[#allocation5 + $0xc0] sm:$0xff]
    %v111 = vld [vmem:[#allocation5 + $0xc8] sm:$0xff]
    %v112 = vld [vmem:[#allocation5 + $0xd0] sm:$0xff]
    %v113 = vld [vmem:[#allocation5 + $0xd8] sm:$0xff]
    %v114 = vld [vmem:[#allocation5 + $0xe0] sm:$0xff]
    %v115 = vld [vmem:[#allocation5 + $0xe8] sm:$0xff]
    %v116 = vld [vmem:[#allocation5 + $0xf0] sm:$0xff]
    %v117 = vld [vmem:[#allocation5 + $0xf8] sm:$0xff]
    %v118 = vld [vmem:[%s2] sm:$0x1]
    %v120 = vlaneseq
    %v121 = vshrl.u32 %v120, 7
    %v122 = vsub.s32 0, %v121
    %v123 = vrot.slane %v118, %v122
    %125 = vmatprep.subr.mxu0 0.0
    %126 = vmatpush1.msra.mxu0 %v86
    %127 = vmatprep.subr.mxu0 0.0
    %128 = vmatpush1.msra.mxu0 %v87
    %129 = vmatprep.subr.mxu0 0.0
    %130 = vmatpush1.msra.mxu0 %v88
    %131 = vmatprep.subr.mxu0 0.0
    %132 = vmatpush1.msra.mxu0 %v89
    %133 = vmatprep.subr.mxu0 0.0
    %134 = vmatpush1.msra.mxu0 %v90
    %135 = vmatprep.subr.mxu0 0.0
    %136 = vmatpush1.msra.mxu0 %v91
    %137 = vmatprep.subr.mxu0 0.0
    %138 = vmatpush1.msra.mxu0 %v92
    %139 = vmatprep.subr.mxu0 0.0
    %140 = vmatpush1.msra.mxu0 %v93
    %141 = vmatprep.subr.mxu0 0.0
    %142 = vmatpush1.msra.mxu0 %v94
    %143 = vmatprep.subr.mxu0 0.0
    %144 = vmatpush1.msra.mxu0 %v95
    %145 = vmatprep.subr.mxu0 0.0
    %146 = vmatpush1.msra.mxu0 %v96
    %147 = vmatprep.subr.mxu0 0.0
    %148 = vmatpush1.msra.mxu0 %v97
    %149 = vmatprep.subr.mxu0 0.0
    %150 = vmatpush1.msra.mxu0 %v98
    %151 = vmatprep.subr.mxu0 0.0
    %152 = vmatpush1.msra.mxu0 %v99
    %153 = vmatprep.subr.mxu0 0.0
    %154 = vmatpush1.msra.mxu0 %v100
    %155 = vmatprep.subr.mxu0 0.0
    %156 = vmatpush1.msra.mxu0 %v101
    %157 = vmatprep.subr.mxu0 0.0
    %158 = vmatpush1.msra.mxu0 %v102
    %159 = vmatprep.subr.mxu0 0.0
    %160 = vmatpush1.msra.mxu0 %v103
    %161 = vmatprep.subr.mxu0 0.0
    %162 = vmatpush1.msra.mxu0 %v104
    %163 = vmatprep.subr.mxu0 0.0
    %164 = vmatpush1.msra.mxu0 %v105
    %165 = vmatprep.subr.mxu0 0.0
    %166 = vmatpush1.msra.mxu0 %v106
    %167 = vmatprep.subr.mxu0 0.0
    %168 = vmatpush1.msra.mxu0 %v107
    %169 = vmatprep.subr.mxu0 0.0
    %170 = vmatpush1.msra.mxu0 %v108
    %171 = vmatprep.subr.mxu0 0.0
    %172 = vmatpush1.msra.mxu0 %v109
    %173 = vmatprep.subr.mxu0 0.0
    %174 = vmatpush1.msra.mxu0 %v110
    %175 = vmatprep.subr.mxu0 0.0
    %176 = vmatpush1.msra.mxu0 %v111
    %177 = vmatprep.subr.mxu0 0.0
    %178 = vmatpush1.msra.mxu0 %v112
    %179 = vmatprep.subr.mxu0 0.0
    %180 = vmatpush1.msra.mxu0 %v113
    %181 = vmatprep.subr.mxu0 0.0
    %182 = vmatpush1.msra.mxu0 %v114
    %183 = vmatprep.subr.mxu0 0.0
    %184 = vmatpush1.msra.mxu0 %v115
    %185 = vmatprep.subr.mxu0 0.0
    %186 = vmatpush1.msra.mxu0 %v116
    %187 = vmatprep.subr.mxu0 0.0
    %188 = vmatpush1.msra.mxu0 %v117
    %189 = vmatprep.mubr.f32.mxu0 %v83
    %190 = vmatmul.mubr.f32.gmra.mrb[0].mxu0 %v82
    %v191 = vpop.f32.mrb[0].mxu0
    %v192 = vadd.f32 %v123, %v191
    %v193 = vpop.f32.mrb[0].mxu0
    %194 = vmatprep.mubr.f32.mxu0 %v85
    %195 = vmatmul.mubr.f32.gmra.mrb[0].mxu0 %v84
    %v196 = vpop.f32.mrb[0].mxu0
    %v197 = vadd.f32 %v123, %v196
    %v198 = vpop.f32.mrb[0].mxu0
    %199 = vdwg.mxu0
    %v200 = vmax.f32 %v192, 0.0
    %v201 = vmax.f32 %v197, 0.0
    %v202 = vld [vmem:[#allocation7] sm:$0xff]
    %v203 = vld [vmem:[#allocation7 + $0x8] sm:$0xff]
    %v204 = vld [vmem:[#allocation7 + $0x10] sm:$0xff]
    %v205 = vld [vmem:[#allocation7 + $0x18] sm:$0xff]
    %v206 = vld [vmem:[#allocation7 + $0x20] sm:$0xff]
    %v207 = vld [vmem:[#allocation7 + $0x28] sm:$0xff]
    %v208 = vld [vmem:[#allocation7 + $0x30] sm:$0xff]
    %v209 = vld [vmem:[#allocation7 + $0x38] sm:$0xff]
    %v210 = vld [vmem:[#allocation7 + $0x40] sm:$0xff]
    %v211 = vld [vmem:[#allocation7 + $0x48] sm:$0xff]
    %v212 = vld [vmem:[#allocation7 + $0x50] sm:$0xff]
    %v213 = vld [vmem:[#allocation7 + $0x58] sm:$0xff]
    %v214 = vld [vmem:[#allocation7 + $0x60] sm:$0xff]
    %v215 = vld [vmem:[#allocation7 + $0x68] sm:$0xff]
    %v216 = vld [vmem:[#allocation7 + $0x70] sm:$0xff]
    %v217 = vld [vmem:[#allocation7 + $0x78] sm:$0xff]
    %v218 = vld [vmem:[%s4] sm:$0x1]
    %v220 = vlaneseq
    %v221 = vshrl.u32 %v220, 7
    %v222 = vsub.s32 0, %v221
    %v223 = vrot.slane %v218, %v222
    %225 = vmatprep.subr.mxu0 0.0
    %226 = vmatpush1.msra.mxu0 %v202
    %227 = vmatprep.subr.mxu0 0.0
    %228 = vmatpush1.msra.mxu0 %v203
    %229 = vmatprep.subr.mxu0 0.0
    %230 = vmatpush1.msra.mxu0 %v204
    %231 = vmatprep.subr.mxu0 0.0
    %232 = vmatpush1.msra.mxu0 %v205
    %233 = vmatprep.subr.mxu0 0.0
    %234 = vmatpush1.msra.mxu0 %v206
    %235 = vmatprep.subr.mxu0 0.0
    %236 = vmatpush1.msra.mxu0 %v207
    %237 = vmatprep.subr.mxu0 0.0
    %238 = vmatpush1.msra.mxu0 %v208
    %239 = vmatprep.subr.mxu0 0.0
    %240 = vmatpush1.msra.mxu0 %v209
    %241 = vmatprep.subr.mxu0 0.0
    %242 = vmatpush1.msra.mxu0 %v210
    %243 = vmatprep.subr.mxu0 0.0
    %244 = vmatpush1.msra.mxu0 %v211
    %245 = vmatprep.subr.mxu0 0.0
    %246 = vmatpush1.msra.mxu0 %v212
    %247 = vmatprep.subr.mxu0 0.0
    %248 = vmatpush1.msra.mxu0 %v213
    %249 = vmatprep.subr.mxu0 0.0
    %250 = vmatpush1.msra.mxu0 %v214
    %251 = vmatprep.subr.mxu0 0.0
    %252 = vmatpush1.msra.mxu0 %v215
    %253 = vmatprep.subr.mxu0 0.0
    %254 = vmatpush1.msra.mxu0 %v216
    %255 = vmatprep.subr.mxu0 0.0
    %256 = vmatpush1.msra.mxu0 %v217
    %257 = vmatprep.subr.mxu0 0.0
    %258 = vmatpush1.msra.mxu0 0.0
    %259 = vmatprep.subr.mxu0 0.0
    %260 = vmatpush1.msra.mxu0 0.0
    %261 = vmatprep.subr.mxu0 0.0
    %262 = vmatpush1.msra.mxu0 0.0
    %263 = vmatprep.subr.mxu0 0.0
    %264 = vmatpush1.msra.mxu0 0.0
    %265 = vmatprep.subr.mxu0 0.0
    %266 = vmatpush1.msra.mxu0 0.0
    %267 = vmatprep.subr.mxu0 0.0
    %268 = vmatpush1.msra.mxu0 0.0
    %269 = vmatprep.subr.mxu0 0.0
    %270 = vmatpush1.msra.mxu0 0.0
    %271 = vmatprep.subr.mxu0 0.0
    %272 = vmatpush1.msra.mxu0 0.0
    %273 = vmatprep.subr.mxu0 0.0
    %274 = vmatpush1.msra.mxu0 0.0
    %275 = vmatprep.subr.mxu0 0.0
    %276 = vmatpush1.msra.mxu0 0.0
    %277 = vmatprep.subr.mxu0 0.0
    %278 = vmatpush1.msra.mxu0 0.0
    %279 = vmatprep.subr.mxu0 0.0
    %280 = vmatpush1.msra.mxu0 0.0
    %281 = vmatprep.subr.mxu0 0.0
    %282 = vmatpush1.msra.mxu0 0.0
    %283 = vmatprep.subr.mxu0 0.0
    %284 = vmatpush1.msra.mxu0 0.0
    %285 = vmatprep.subr.mxu0 0.0
    %286 = vmatpush1.msra.mxu0 0.0
    %287 = vmatprep.subr.mxu0 0.0
    %288 = vmatpush1.msra.mxu0 0.0
    %289 = vmatprep.mubr.f32.mxu0 0.0
    %290 = vmatmul.mubr.f32.gmra.mrb[0].mxu0 %v200
    %v291 = vpop.f32.mrb[0].mxu0
    %v292 = vadd.f32 %v223, %v291
    %v293 = vpop.f32.mrb[0].mxu0
    %294 = vmatprep.mubr.f32.mxu0 0.0
    %295 = vmatmul.mubr.f32.gmra.mrb[0].mxu0 %v201
    %v296 = vpop.f32.mrb[0].mxu0
    %v297 = vadd.f32 %v223, %v296
    %v298 = vpop.f32.mrb[0].mxu0
    %299 = vdwg.mxu0
    %v300 = vmax.f32 %v292, 0.0
    %v301 = vmax.f32 %v297, 0.0
    %v302 = vld [vmem:[#allocation8] sm:$0xff]
    %v303 = vld [vmem:[#allocation8 + $0x8] sm:$0xff]
    %v304 = vld [vmem:[#allocation8 + $0x10] sm:$0xff]
    %v305 = vld [vmem:[#allocation8 + $0x18] sm:$0xff]
    %v306 = vld [vmem:[#allocation8 + $0x20] sm:$0xff]
    %v307 = vld [vmem:[#allocation8 + $0x28] sm:$0xff]
    %v308 = vld [vmem:[#allocation8 + $0x30] sm:$0xff]
    %v309 = vld [vmem:[#allocation8 + $0x38] sm:$0xff]
    %v310 = vld [vmem:[#allocation8 + $0x40] sm:$0xff]
    %v311 = vld [vmem:[#allocation8 + $0x48] sm:$0xff]
    %v312 = vld [vmem:[#allocation8 + $0x50] sm:$0xff]
    %v313 = vld [vmem:[#allocation8 + $0x58] sm:$0xff]
    %v314 = vld [vmem:[#allocation8 + $0x60] sm:$0xff]
    %v315 = vld [vmem:[#allocation8 + $0x68] sm:$0xff]
    %v316 = vld [vmem:[#allocation8 + $0x70] sm:$0xff]
    %v317 = vld [vmem:[#allocation8 + $0x78] sm:$0xff]
    %v318 = vld [vmem:[%s6] sm:$0x1]
    %v320 = vlaneseq
    %v321 = vshrl.u32 %v320, 7
    %v322 = vsub.s32 0, %v321
    %v323 = vrot.slane %v318, %v322
    %325 = vmatprep.subr.mxu0 0.0
    %326 = vmatpush1.msra.mxu0 %v302
    %327 = vmatprep.subr.mxu0 0.0
    %328 = vmatpush1.msra.mxu0 %v303
    %329 = vmatprep.subr.mxu0 0.0
    %330 = vmatpush1.msra.mxu0 %v304
    %331 = vmatprep.subr.mxu0 0.0
    %332 = vmatpush1.msra.mxu0 %v305
    %333 = vmatprep.subr.mxu0 0.0
    %334 = vmatpush1.msra.mxu0 %v306
    %335 = vmatprep.subr.mxu0 0.0
    %336 = vmatpush1.msra.mxu0 %v307
    %337 = vmatprep.subr.mxu0 0.0
    %338 = vmatpush1.msra.mxu0 %v308
    %339 = vmatprep.subr.mxu0 0.0
    %340 = vmatpush1.msra.mxu0 %v309
    %341 = vmatprep.subr.mxu0 0.0
    %342 = vmatpush1.msra.mxu0 %v310
    %343 = vmatprep.subr.mxu0 0.0
    %344 = vmatpush1.msra.mxu0 %v311
    %345 = vmatprep.subr.mxu0 0.0
    %346 = vmatpush1.msra.mxu0 %v312
    %347 = vmatprep.subr.mxu0 0.0
    %348 = vmatpush1.msra.mxu0 %v313
    %349 = vmatprep.subr.mxu0 0.0
    %350 = vmatpush1.msra.mxu0 %v314
    %351 = vmatprep.subr.mxu0 0.0
    %352 = vmatpush1.msra.mxu0 %v315
    %353 = vmatprep.subr.mxu0 0.0
    %354 = vmatpush1.msra.mxu0 %v316
    %355 = vmatprep.subr.mxu0 0.0
    %356 = vmatpush1.msra.mxu0 %v317
    %357 = vmatprep.subr.mxu0 0.0
    %358 = vmatpush1.msra.mxu0 0.0
    %359 = vmatprep.subr.mxu0 0.0
    %360 = vmatpush1.msra.mxu0 0.0
    %361 = vmatprep.subr.mxu0 0.0
    %362 = vmatpush1.msra.mxu0 0.0
    %363 = vmatprep.subr.mxu0 0.0
    %364 = vmatpush1.msra.mxu0 0.0
    %365 = vmatprep.subr.mxu0 0.0
    %366 = vmatpush1.msra.mxu0 0.0
    %367 = vmatprep.subr.mxu0 0.0
    %368 = vmatpush1.msra.mxu0 0.0
    %369 = vmatprep.subr.mxu0 0.0
    %370 = vmatpush1.msra.mxu0 0.0
    %371 = vmatprep.subr.mxu0 0.0
    %372 = vmatpush1.msra.mxu0 0.0
    %373 = vmatprep.subr.mxu0 0.0
    %374 = vmatpush1.msra.mxu0 0.0
    %375 = vmatprep.subr.mxu0 0.0
    %376 = vmatpush1.msra.mxu0 0.0
    %377 = vmatprep.subr.mxu0 0.0
    %378 = vmatpush1.msra.mxu0 0.0
    %379 = vmatprep.subr.mxu0 0.0
    %380 = vmatpush1.msra.mxu0 0.0
    %381 = vmatprep.subr.mxu0 0.0
    %382 = vmatpush1.msra.mxu0 0.0
    %383 = vmatprep.subr.mxu0 0.0
    %384 = vmatpush1.msra.mxu0 0.0
    %385 = vmatprep.subr.mxu0 0.0
    %386 = vmatpush1.msra.mxu0 0.0
    %387 = vmatprep.subr.mxu0 0.0
    %388 = vmatpush1.msra.mxu0 0.0
    %389 = vmatprep.mubr.f32.mxu0 0.0
    %390 = vmatmul.mubr.f32.gmra.mrb[0].mxu0 %v300
    %v391 = vpop.f32.mrb[0].mxu0
    %v392 = vadd.f32 %v323, %v391
    %v393 = vpop.f32.mrb[0].mxu0
    %394 = vmatprep.mubr.f32.mxu0 0.0
    %395 = vmatmul.mubr.f32.gmra.mrb[0].mxu0 %v301
    %v396 = vpop.f32.mrb[0].mxu0
    %v397 = vadd.f32 %v323, %v396
    %v398 = vpop.f32.mrb[0].mxu0
    %399 = vdwg.mxu0
    %400 = vst [vmem:[#allocation10] sm:$0xff] %v392
    %401 = vst [vmem:[#allocation10 + $0x8] sm:$0xff] %v397
    // Predicated region
    $region46: #{tpu_custom_call.1} parent=1 // pred_check
      _
    $region47: #{tpu_custom_call.1} parent=1 // pred_check_branch
      %403 = sbr.rel (0) target = $region49
    $region48: #{tpu_custom_call.1} parent=1 // pred_region
      %s405 = ssub.s32 256, 256
      %406 = vsyncadd [#allocation4], %s405
      %s407 = sshll.u32 [#allocation10], 4
      %s408 = int_to_ptr.vmem [resolvable:$true] %s407
      %413 = dma.vmem_to_hbm [thread:$0]  %s408, 256, %s7, [#allocation4], 128, 128, 8
    $region49: #{tpu_custom_call.1} parent=1 // pred_fallthru
      _
    // Predicated region
    $region50: #{tpu_custom_call.1} parent=1 // pred_check
      _
    $region51: #{tpu_custom_call.1} parent=1 // pred_check_branch
      %415 = sbr.rel (0) target = $region53
    $region52: #{tpu_custom_call.1} parent=1 // pred_region
      %416 = dma.done [#allocation4], 256
    $region53: #{tpu_custom_call.1} parent=1 // pred_fallthru
      _
    %417 = vsyncpa [#allocation3], 1
    %418 = vsyncpa [#allocation6], 1
    %419 = vsyncpa [#allocation9], 1
    %420 = vsyncpa [#allocation4], 1

</llo_original>
